<compile_context>
chip_gen: v6e
topology: v6e:2x2x1
jax: 0.10.0
libtpu: 0.0.40
codegen_flags: <defaults>
</compile_context>

<pallas_src>
import jax
import jax.numpy as jnp
from jax.experimental import pallas as pl
from jax.experimental.pallas import tpu as pltpu

H_PAD = 128  # lane-padded hidden width for all MLP intermediates


def din_kernel(t_ref, h_ref,
               w1t_ref, w1h_ref, w1x_ref, b1_ref,
               w2_ref, b2_ref, w3_ref,
               wd1a_ref, wd1b_ref, bd1_ref,
               wd2_ref, bd2_ref, wd3_ref,
               b3_ref, bd3_ref,
               out_ref):
    t = t_ref[...]                               # (TB, D)
    h3 = h_ref[...]                              # (TB, S, D)
    TB, S, D = h3.shape
    h2 = h3.reshape(TB * S, D)
    th = (h3 * t[:, None, :]).reshape(TB * S, D)   # broadcast inside the VPU op

    # ---- attention MLP on cat([t, h, t*h, t-h]) with folded weights ----
    z_t = jnp.dot(t, w1t_ref[...], preferred_element_type=jnp.float32)   # (TB, 128)
    z_hs = (jnp.dot(h2, w1h_ref[...], preferred_element_type=jnp.float32)
            + jnp.dot(th, w1x_ref[...], preferred_element_type=jnp.float32))
    z = z_hs.reshape(TB, S, H_PAD) + z_t[:, None, :] + b1_ref[...]        # (TB,S,128)
    a1 = jnp.maximum(z, 0.0).reshape(TB * S, H_PAD)
    a2 = jnp.maximum(
        jnp.dot(a1, w2_ref[...], preferred_element_type=jnp.float32)
        + b2_ref[...], 0.0)                                               # (TB*S,128)
    a2 = a2.reshape(TB, S, H_PAD)
    logits = jnp.sum(a2 * w3_ref[...], axis=-1) + b3_ref[0, 0]            # (TB, S)

    # ---- softmax over the history axis (PyTorch dim=1) ----
    m = jnp.max(logits, axis=1, keepdims=True)
    e = jnp.exp(logits - m)
    inv = pl.reciprocal(jnp.sum(e, axis=1, keepdims=True), approx=True)
    attn = e * inv                                                        # (TB, S)

    # weighted history: multiply + sublane reduce instead of an M=1 matmul
    weighted = jnp.sum(attn[:, :, None] * h3, axis=1)                     # (TB, D)

    # ---- DNN on cat([target, weighted]) (weights split per chunk) ----
    d1 = jnp.maximum(
        jnp.dot(t, wd1a_ref[...], preferred_element_type=jnp.float32)
        + jnp.dot(weighted, wd1b_ref[...], preferred_element_type=jnp.float32)
        + bd1_ref[...], 0.0)                                              # (TB, 128)
    d2 = jnp.maximum(
        jnp.dot(d1, wd2_ref[...], preferred_element_type=jnp.float32)
        + bd2_ref[...], 0.0)                                              # (TB, 128)
    out_ref[...] = (jnp.sum(d2 * wd3_ref[...], axis=-1, keepdims=True)
                    + bd3_ref[0, 0]).astype(out_ref.dtype)                # (TB, 1)


def init_params(key, num_items, embedding_dim=32, hidden_units=(64, 32)):
    """Raw parameters matching the PyTorch module (weights stored (in, out))."""
    D = embedding_dim
    ks = jax.random.split(key, 7)

    def lin(k, fan_in, fan_out):
        bound = 1.0 / jnp.sqrt(fan_in)
        kw, kb = jax.random.split(k)
        w = jax.random.uniform(kw, (fan_in, fan_out), jnp.float32, -bound, bound)
        b = jax.random.uniform(kb, (1, fan_out), jnp.float32, -bound, bound)
        return w, b

    emb = jax.random.normal(ks[0], (num_items + 1, D), jnp.float32)
    emb = emb.at[0].set(0.0)                       # padding_idx=0 -> zero row

    w1, b1 = lin(ks[1], 4 * D, 80)
    w2, b2 = lin(ks[2], 80, 40)
    w3, b3 = lin(ks[3], 40, 1)
    wd1, bd1 = lin(ks[4], 2 * D, hidden_units[0])
    wd2, bd2 = lin(ks[5], hidden_units[0], hidden_units[1])
    wd3, bd3 = lin(ks[6], hidden_units[1], 1)

    return dict(emb=emb, w1=w1, b1=b1, w2=w2, b2=b2, w3=w3, b3=b3,
                wd1=wd1, bd1=bd1, wd2=wd2, bd2=bd2, wd3=wd3, bd3=bd3)


def pack_params(params):
    """Fold/zero-pad raw weights into the lane-dense kernel layout (host-side)."""
    D = params["emb"].shape[1]

    def pad_cols(w):
        return jnp.pad(w, ((0, 0), (0, H_PAD - w.shape[1])))

    def pad_both(w):
        return jnp.pad(w, ((0, H_PAD - w.shape[0]), (0, H_PAD - w.shape[1])))

    w1 = params["w1"]                              # (4D, 80)
    w1a, w1b, w1c, w1d = (w1[0 * D:1 * D], w1[1 * D:2 * D],
                          w1[2 * D:3 * D], w1[3 * D:4 * D])
    wd1 = params["wd1"]                            # (2D, 64)

    return dict(
        # folded first attention layer: t-term, h-term, (t*h)-term
        w1t=pad_cols(w1a + w1d), w1h=pad_cols(w1b - w1d), w1x=pad_cols(w1c),
        b1=pad_cols(params["b1"]),
        w2=pad_both(params["w2"]), b2=pad_cols(params["b2"]),
        w3=pad_cols(params["w3"].T),               # (1, 128)
        b3=params["b3"].reshape(1, 1),
        wd1a=pad_cols(wd1[:D]), wd1b=pad_cols(wd1[D:]),
        bd1=pad_cols(params["bd1"]),
        wd2=pad_both(params["wd2"]), bd2=pad_cols(params["bd2"]),
        wd3=pad_cols(params["wd3"].T),             # (1, 128)
        bd3=params["bd3"].reshape(1, 1),
    )


def din_forward(params, kernel_params, target_item, history_seq, *,
                batch_tile=None):
    # Embedding gather is data-dependent glue, done in plain JAX.
    emb = params["emb"]
    t_e = emb[target_item].astype(jnp.float32)     # (B, D)
    h_e = emb[history_seq].astype(jnp.float32)     # (B, S, D)
    B, S = history_seq.shape
    D = emb.shape[1]

    if batch_tile is None:
        batch_tile = B if B <= 128 else 128        # modest tile; fits v7x 64 MiB VMEM
    TB = batch_tile
    grid = (pl.cdiv(B, TB),)

    kp = kernel_params

    def wspec(shape):
        # whole weight resident in VMEM, same block for every grid step
        return pl.BlockSpec(shape, lambda i: (0, 0))

    smem_scalar = pl.BlockSpec((1, 1), lambda i: (0, 0),
                               memory_space=pltpu.MemorySpace.SMEM)

    in_specs = [
        pl.BlockSpec((TB, D), lambda i: (i, 0)),
        pl.BlockSpec((TB, S, D), lambda i: (i, 0, 0)),
        wspec((D, H_PAD)), wspec((D, H_PAD)), wspec((D, H_PAD)), wspec((1, H_PAD)),
        wspec((H_PAD, H_PAD)), wspec((1, H_PAD)), wspec((1, H_PAD)),
        wspec((D, H_PAD)), wspec((D, H_PAD)), wspec((1, H_PAD)),
        wspec((H_PAD, H_PAD)), wspec((1, H_PAD)), wspec((1, H_PAD)),
        smem_scalar, smem_scalar,
    ]

    out = pl.pallas_call(
        din_kernel,
        out_shape=jax.ShapeDtypeStruct((B, 1), jnp.float32),
        grid=grid,
        in_specs=in_specs,
        out_specs=pl.BlockSpec((TB, 1), lambda i: (i, 0)),
        compiler_params=pltpu.CompilerParams(
            dimension_semantics=("parallel",),
            vmem_limit_bytes=32 * 1024 * 1024),
    )(t_e, h_e,
      kp["w1t"], kp["w1h"], kp["w1x"], kp["b1"],
      kp["w2"], kp["b2"], kp["w3"],
      kp["wd1a"], kp["wd1b"], kp["bd1"],
      kp["wd2"], kp["bd2"], kp["wd3"],
      kp["b3"], kp["bd3"])
    return jnp.squeeze(out)                        # matches PyTorch output.squeeze()


def din_reference(params, target_item, history_seq):
    # Pure-JAX reference reproducing the PyTorch forward exactly.
    emb = params["emb"]
    t = emb[target_item]
    h = emb[history_seq]
    B, S, D = h.shape
    te = jnp.broadcast_to(t[:, None, :], (B, S, D))
    ai = jnp.concatenate([te, h, te * h, te - h], axis=-1)
    a1 = jax.nn.relu(ai @ params["w1"] + params["b1"][0])
    a2 = jax.nn.relu(a1 @ params["w2"] + params["b2"][0])
    logits = a2 @ params["w3"] + params["b3"][0]               # (B, S, 1)
    attn = jax.nn.softmax(logits, axis=1)
    weighted = jnp.sum(attn * h, axis=1)                       # (B, D)
    di = jnp.concatenate([t, weighted], axis=-1)
    d1 = jax.nn.relu(di @ params["wd1"] + params["bd1"][0])
    d2 = jax.nn.relu(d1 @ params["wd2"] + params["bd2"][0])
    out = d2 @ params["wd3"] + params["bd3"][0]                # (B, 1)
    return jnp.squeeze(out)


if __name__ == "__main__":
    num_items = 20
    embedding_dim = 32
    B, S = 2, 8

    key = jax.random.PRNGKey(0)
    kparam, kt, kh = jax.random.split(key, 3)
    params = init_params(kparam, num_items, embedding_dim)
    kernel_params = pack_params(params)

    target_item = jax.random.randint(kt, (B,), 1, num_items + 1, jnp.int32)
    history_seq = jax.random.randint(kh, (B, S), 0, num_items + 1, jnp.int32)

    out = din_forward(params, kernel_params, target_item, history_seq)
    out = jax.block_until_ready(out)

    ref = din_reference(params, target_item, history_seq)
    assert out.shape == ref.shape == (B,)
    assert jnp.allclose(out, ref, rtol=1e-3, atol=1e-3), (out, ref)
    print("KERNEL_OK")
</pallas_src>

<mosaic_0001>
module attributes {stable_mosaic.version = 11 : i64} {
  func.func @din_kernel(%arg0: i32, %arg1: memref<2x32xf32, #tpu.memory_space<vmem>>, %arg2: memref<2x8x32xf32, #tpu.memory_space<vmem>>, %arg3: memref<32x128xf32, #tpu.memory_space<vmem>>, %arg4: memref<32x128xf32, #tpu.memory_space<vmem>>, %arg5: memref<32x128xf32, #tpu.memory_space<vmem>>, %arg6: memref<1x128xf32, #tpu.memory_space<vmem>>, %arg7: memref<128x128xf32, #tpu.memory_space<vmem>>, %arg8: memref<1x128xf32, #tpu.memory_space<vmem>>, %arg9: memref<1x128xf32, #tpu.memory_space<vmem>>, %arg10: memref<32x128xf32, #tpu.memory_space<vmem>>, %arg11: memref<32x128xf32, #tpu.memory_space<vmem>>, %arg12: memref<1x128xf32, #tpu.memory_space<vmem>>, %arg13: memref<128x128xf32, #tpu.memory_space<vmem>>, %arg14: memref<1x128xf32, #tpu.memory_space<vmem>>, %arg15: memref<1x128xf32, #tpu.memory_space<vmem>>, %arg16: memref<1x1xf32, #tpu.memory_space<smem>>, %arg17: memref<1x1xf32, #tpu.memory_space<smem>>, %arg18: memref<2x1xf32, #tpu.memory_space<vmem>>) attributes {dimension_semantics = [#tpu.dimension_semantics<parallel>], iteration_bounds = array<i64: 1>, scalar_prefetch = 0 : i64, scratch_operands = 0 : i64, tpu.core_type = #tpu.core_type<tc>, window_params = [{transform_indices = @transform_0, window_bounds = array<i64: 2, 32>}, {transform_indices = @transform_1, window_bounds = array<i64: 2, 8, 32>}, {pipeline_mode = #tpu.pipeline_mode<synchronous>, transform_indices = @transform_2, window_bounds = array<i64: 32, 128>}, {pipeline_mode = #tpu.pipeline_mode<synchronous>, transform_indices = @transform_3, window_bounds = array<i64: 32, 128>}, {pipeline_mode = #tpu.pipeline_mode<synchronous>, transform_indices = @transform_4, window_bounds = array<i64: 32, 128>}, {pipeline_mode = #tpu.pipeline_mode<synchronous>, transform_indices = @transform_5, window_bounds = array<i64: 1, 128>}, {pipeline_mode = #tpu.pipeline_mode<synchronous>, transform_indices = @transform_6, window_bounds = array<i64: 128, 128>}, {pipeline_mode = #tpu.pipeline_mode<synchronous>, transform_indices = @transform_7, window_bounds = array<i64: 1, 128>}, {pipeline_mode = #tpu.pipeline_mode<synchronous>, transform_indices = @transform_8, window_bounds = array<i64: 1, 128>}, {pipeline_mode = #tpu.pipeline_mode<synchronous>, transform_indices = @transform_9, window_bounds = array<i64: 32, 128>}, {pipeline_mode = #tpu.pipeline_mode<synchronous>, transform_indices = @transform_10, window_bounds = array<i64: 32, 128>}, {pipeline_mode = #tpu.pipeline_mode<synchronous>, transform_indices = @transform_11, window_bounds = array<i64: 1, 128>}, {pipeline_mode = #tpu.pipeline_mode<synchronous>, transform_indices = @transform_12, window_bounds = array<i64: 128, 128>}, {pipeline_mode = #tpu.pipeline_mode<synchronous>, transform_indices = @transform_13, window_bounds = array<i64: 1, 128>}, {pipeline_mode = #tpu.pipeline_mode<synchronous>, transform_indices = @transform_14, window_bounds = array<i64: 1, 128>}, {transform_indices = @transform_15, window_bounds = array<i64: 1, 1>}, {transform_indices = @transform_16, window_bounds = array<i64: 1, 1>}, {transform_indices = @transform_17, window_bounds = array<i64: 2, 1>}]} {
    %c0 = arith.constant 0 : index
    %c0_0 = arith.constant 0 : index
    %0 = vector.load %arg1[%c0, %c0_0] : memref<2x32xf32, #tpu.memory_space<vmem>>, vector<2x32xf32>
    %c0_1 = arith.constant 0 : index
    %c0_2 = arith.constant 0 : index
    %c0_3 = arith.constant 0 : index
    %1 = vector.load %arg2[%c0_1, %c0_2, %c0_3] : memref<2x8x32xf32, #tpu.memory_space<vmem>>, vector<2x8x32xf32>
    %2 = vector.shape_cast %1 : vector<2x8x32xf32> to vector<16x32xf32>
    %3 = vector.shape_cast %0 : vector<2x32xf32> to vector<2x1x32xf32>
    %4 = vector.broadcast %3 : vector<2x1x32xf32> to vector<2x8x32xf32>
    %5 = arith.mulf %1, %4 : vector<2x8x32xf32>
    %6 = vector.shape_cast %5 : vector<2x8x32xf32> to vector<16x32xf32>
    %c0_4 = arith.constant 0 : index
    %c0_5 = arith.constant 0 : index
    %7 = vector.load %arg3[%c0_4, %c0_5] : memref<32x128xf32, #tpu.memory_space<vmem>>, vector<32x128xf32>
    %cst = arith.constant dense<0.000000e+00> : vector<2x128xf32>
    %8 = tpu.matmul %0, %7, %cst {dimension_numbers = #tpu.dot_dimension_numbers<[1], [0], [0], [1], [0, 0, 1, 1], [], []>} : vector<2x32xf32>, vector<32x128xf32>, vector<2x128xf32> -> vector<2x128xf32>
    %c0_6 = arith.constant 0 : index
    %c0_7 = arith.constant 0 : index
    %9 = vector.load %arg4[%c0_6, %c0_7] : memref<32x128xf32, #tpu.memory_space<vmem>>, vector<32x128xf32>
    %cst_8 = arith.constant dense<0.000000e+00> : vector<16x128xf32>
    %10 = tpu.matmul %2, %9, %cst_8 {dimension_numbers = #tpu.dot_dimension_numbers<[1], [0], [0], [1], [0, 0, 1, 1], [], []>} : vector<16x32xf32>, vector<32x128xf32>, vector<16x128xf32> -> vector<16x128xf32>
    %c0_9 = arith.constant 0 : index
    %c0_10 = arith.constant 0 : index
    %11 = vector.load %arg5[%c0_9, %c0_10] : memref<32x128xf32, #tpu.memory_space<vmem>>, vector<32x128xf32>
    %cst_11 = arith.constant dense<0.000000e+00> : vector<16x128xf32>
    %12 = tpu.matmul %6, %11, %cst_11 {dimension_numbers = #tpu.dot_dimension_numbers<[1], [0], [0], [1], [0, 0, 1, 1], [], []>} : vector<16x32xf32>, vector<32x128xf32>, vector<16x128xf32> -> vector<16x128xf32>
    %13 = arith.addf %10, %12 : vector<16x128xf32>
    %14 = vector.shape_cast %13 : vector<16x128xf32> to vector<2x8x128xf32>
    %15 = vector.shape_cast %8 : vector<2x128xf32> to vector<2x1x128xf32>
    %16 = vector.broadcast %15 : vector<2x1x128xf32> to vector<2x8x128xf32>
    %17 = arith.addf %14, %16 : vector<2x8x128xf32>
    %c0_12 = arith.constant 0 : index
    %c0_13 = arith.constant 0 : index
    %18 = vector.load %arg6[%c0_12, %c0_13] : memref<1x128xf32, #tpu.memory_space<vmem>>, vector<1x128xf32>
    %19 = vector.shape_cast %18 : vector<1x128xf32> to vector<1x1x128xf32>
    %20 = vector.broadcast %19 : vector<1x1x128xf32> to vector<2x8x128xf32>
    %21 = arith.addf %17, %20 : vector<2x8x128xf32>
    %cst_14 = arith.constant 0.000000e+00 : f32
    %22 = vector.broadcast %cst_14 : f32 to vector<2x8x128xf32>
    %23 = arith.maximumf %21, %22 : vector<2x8x128xf32>
    %24 = vector.shape_cast %23 : vector<2x8x128xf32> to vector<16x128xf32>
    %c0_15 = arith.constant 0 : index
    %c0_16 = arith.constant 0 : index
    %25 = vector.load %arg7[%c0_15, %c0_16] : memref<128x128xf32, #tpu.memory_space<vmem>>, vector<128x128xf32>
    %cst_17 = arith.constant dense<0.000000e+00> : vector<16x128xf32>
    %26 = tpu.matmul %24, %25, %cst_17 {dimension_numbers = #tpu.dot_dimension_numbers<[1], [0], [0], [1], [0, 0, 1, 1], [], []>} : vector<16x128xf32>, vector<128x128xf32>, vector<16x128xf32> -> vector<16x128xf32>
    %c0_18 = arith.constant 0 : index
    %c0_19 = arith.constant 0 : index
    %27 = vector.load %arg8[%c0_18, %c0_19] : memref<1x128xf32, #tpu.memory_space<vmem>>, vector<1x128xf32>
    %28 = vector.broadcast %27 : vector<1x128xf32> to vector<16x128xf32>
    %29 = arith.addf %26, %28 : vector<16x128xf32>
    %cst_20 = arith.constant 0.000000e+00 : f32
    %30 = vector.broadcast %cst_20 : f32 to vector<16x128xf32>
    %31 = arith.maximumf %29, %30 : vector<16x128xf32>
    %32 = vector.shape_cast %31 : vector<16x128xf32> to vector<2x8x128xf32>
    %c0_21 = arith.constant 0 : index
    %c0_22 = arith.constant 0 : index
    %33 = vector.load %arg9[%c0_21, %c0_22] : memref<1x128xf32, #tpu.memory_space<vmem>>, vector<1x128xf32>
    %34 = vector.shape_cast %33 : vector<1x128xf32> to vector<1x1x128xf32>
    %35 = vector.broadcast %34 : vector<1x1x128xf32> to vector<2x8x128xf32>
    %36 = arith.mulf %32, %35 : vector<2x8x128xf32>
    %cst_23 = arith.constant dense<0.000000e+00> : vector<2x8xf32>
    %37 = vector.multi_reduction <add>, %36, %cst_23 [2] : vector<2x8x128xf32> to vector<2x8xf32>
    %c0_24 = arith.constant 0 : index
    %c0_25 = arith.constant 0 : index
    %38 = memref.load %arg16[%c0_24, %c0_25] : memref<1x1xf32, #tpu.memory_space<smem>>
    %39 = vector.broadcast %38 : f32 to vector<2x8xf32>
    %40 = arith.addf %37, %39 : vector<2x8xf32>
    %cst_26 = arith.constant dense<0xFF800000> : vector<2xf32>
    %41 = vector.multi_reduction <maximumf>, %40, %cst_26 [1] : vector<2x8xf32> to vector<2xf32>
    %42 = vector.shape_cast %41 : vector<2xf32> to vector<2x1xf32>
    %43 = vector.broadcast %42 : vector<2x1xf32> to vector<2x8xf32>
    %44 = arith.subf %40, %43 : vector<2x8xf32>
    %45 = math.exp %44 : vector<2x8xf32>
    %cst_27 = arith.constant dense<0.000000e+00> : vector<2xf32>
    %46 = vector.multi_reduction <add>, %45, %cst_27 [1] : vector<2x8xf32> to vector<2xf32>
    %47 = vector.shape_cast %46 : vector<2xf32> to vector<2x1xf32>
    %48 = tpu.reciprocal %47 {approx = true} : vector<2x1xf32> -> vector<2x1xf32>
    %49 = vector.broadcast %48 : vector<2x1xf32> to vector<2x8xf32>
    %50 = arith.mulf %45, %49 : vector<2x8xf32>
    %51 = vector.shape_cast %50 : vector<2x8xf32> to vector<2x8x1xf32>
    %52 = vector.broadcast %51 : vector<2x8x1xf32> to vector<2x8x32xf32>
    %53 = arith.mulf %52, %1 : vector<2x8x32xf32>
    %cst_28 = arith.constant dense<0.000000e+00> : vector<2x32xf32>
    %54 = vector.multi_reduction <add>, %53, %cst_28 [1] : vector<2x8x32xf32> to vector<2x32xf32>
    %c0_29 = arith.constant 0 : index
    %c0_30 = arith.constant 0 : index
    %55 = vector.load %arg10[%c0_29, %c0_30] : memref<32x128xf32, #tpu.memory_space<vmem>>, vector<32x128xf32>
    %cst_31 = arith.constant dense<0.000000e+00> : vector<2x128xf32>
    %56 = tpu.matmul %0, %55, %cst_31 {dimension_numbers = #tpu.dot_dimension_numbers<[1], [0], [0], [1], [0, 0, 1, 1], [], []>} : vector<2x32xf32>, vector<32x128xf32>, vector<2x128xf32> -> vector<2x128xf32>
    %c0_32 = arith.constant 0 : index
    %c0_33 = arith.constant 0 : index
    %57 = vector.load %arg11[%c0_32, %c0_33] : memref<32x128xf32, #tpu.memory_space<vmem>>, vector<32x128xf32>
    %cst_34 = arith.constant dense<0.000000e+00> : vector<2x128xf32>
    %58 = tpu.matmul %54, %57, %cst_34 {dimension_numbers = #tpu.dot_dimension_numbers<[1], [0], [0], [1], [0, 0, 1, 1], [], []>} : vector<2x32xf32>, vector<32x128xf32>, vector<2x128xf32> -> vector<2x128xf32>
    %59 = arith.addf %56, %58 : vector<2x128xf32>
    %c0_35 = arith.constant 0 : index
    %c0_36 = arith.constant 0 : index
    %60 = vector.load %arg12[%c0_35, %c0_36] : memref<1x128xf32, #tpu.memory_space<vmem>>, vector<1x128xf32>
    %61 = vector.broadcast %60 : vector<1x128xf32> to vector<2x128xf32>
    %62 = arith.addf %59, %61 : vector<2x128xf32>
    %cst_37 = arith.constant 0.000000e+00 : f32
    %63 = vector.broadcast %cst_37 : f32 to vector<2x128xf32>
    %64 = arith.maximumf %62, %63 : vector<2x128xf32>
    %c0_38 = arith.constant 0 : index
    %c0_39 = arith.constant 0 : index
    %65 = vector.load %arg13[%c0_38, %c0_39] : memref<128x128xf32, #tpu.memory_space<vmem>>, vector<128x128xf32>
    %cst_40 = arith.constant dense<0.000000e+00> : vector<2x128xf32>
    %66 = tpu.matmul %64, %65, %cst_40 {dimension_numbers = #tpu.dot_dimension_numbers<[1], [0], [0], [1], [0, 0, 1, 1], [], []>} : vector<2x128xf32>, vector<128x128xf32>, vector<2x128xf32> -> vector<2x128xf32>
    %c0_41 = arith.constant 0 : index
    %c0_42 = arith.constant 0 : index
    %67 = vector.load %arg14[%c0_41, %c0_42] : memref<1x128xf32, #tpu.memory_space<vmem>>, vector<1x128xf32>
    %68 = vector.broadcast %67 : vector<1x128xf32> to vector<2x128xf32>
    %69 = arith.addf %66, %68 : vector<2x128xf32>
    %cst_43 = arith.constant 0.000000e+00 : f32
    %70 = vector.broadcast %cst_43 : f32 to vector<2x128xf32>
    %71 = arith.maximumf %69, %70 : vector<2x128xf32>
    %c0_44 = arith.constant 0 : index
    %c0_45 = arith.constant 0 : index
    %72 = vector.load %arg15[%c0_44, %c0_45] : memref<1x128xf32, #tpu.memory_space<vmem>>, vector<1x128xf32>
    %73 = vector.broadcast %72 : vector<1x128xf32> to vector<2x128xf32>
    %74 = arith.mulf %71, %73 : vector<2x128xf32>
    %cst_46 = arith.constant dense<0.000000e+00> : vector<2xf32>
    %75 = vector.multi_reduction <add>, %74, %cst_46 [1] : vector<2x128xf32> to vector<2xf32>
    %76 = vector.shape_cast %75 : vector<2xf32> to vector<2x1xf32>
    %c0_47 = arith.constant 0 : index
    %c0_48 = arith.constant 0 : index
    %77 = memref.load %arg17[%c0_47, %c0_48] : memref<1x1xf32, #tpu.memory_space<smem>>
    %78 = vector.broadcast %77 : f32 to vector<2x1xf32>
    %79 = arith.addf %76, %78 : vector<2x1xf32>
    %c0_49 = arith.constant 0 : index
    %c0_50 = arith.constant 0 : index
    %80 = vector.load %arg18[%c0_49, %c0_50] : memref<2x1xf32, #tpu.memory_space<vmem>>, vector<2x1xf32>
    tpu.vector_store %arg18[%c0_49, %c0_50], %79 {strides = array<i32>} : memref<2x1xf32, #tpu.memory_space<vmem>>, vector<2x1xf32>,
    return
  }
  func.func @transform_0(%arg0: i32) -> (i32, i32) {
    %c0_i32 = arith.constant 0 : i32
    %c0_i32_0 = arith.constant 0 : i32
    return %arg0, %c0_i32 : i32, i32
  }
  func.func @transform_1(%arg0: i32) -> (i32, i32, i32) {
    %c0_i32 = arith.constant 0 : i32
    %c0_i32_0 = arith.constant 0 : i32
    %c0_i32_1 = arith.constant 0 : i32
    return %arg0, %c0_i32, %c0_i32_0 : i32, i32, i32
  }
  func.func @transform_2(%arg0: i32) -> (i32, i32) {
    %c0_i32 = arith.constant 0 : i32
    %c0_i32_0 = arith.constant 0 : i32
    %c0_i32_1 = arith.constant 0 : i32
    return %c0_i32, %c0_i32_0 : i32, i32
  }
  func.func @transform_3(%arg0: i32) -> (i32, i32) {
    %c0_i32 = arith.constant 0 : i32
    %c0_i32_0 = arith.constant 0 : i32
    %c0_i32_1 = arith.constant 0 : i32
    return %c0_i32, %c0_i32_0 : i32, i32
  }
  func.func @transform_4(%arg0: i32) -> (i32, i32) {
    %c0_i32 = arith.constant 0 : i32
    %c0_i32_0 = arith.constant 0 : i32
    %c0_i32_1 = arith.constant 0 : i32
    return %c0_i32, %c0_i32_0 : i32, i32
  }
  func.func @transform_5(%arg0: i32) -> (i32, i32) {
    %c0_i32 = arith.constant 0 : i32
    %c0_i32_0 = arith.constant 0 : i32
    %c0_i32_1 = arith.constant 0 : i32
    return %c0_i32, %c0_i32_0 : i32, i32
  }
  func.func @transform_6(%arg0: i32) -> (i32, i32) {
    %c0_i32 = arith.constant 0 : i32
    %c0_i32_0 = arith.constant 0 : i32
    %c0_i32_1 = arith.constant 0 : i32
    return %c0_i32, %c0_i32_0 : i32, i32
  }
  func.func @transform_7(%arg0: i32) -> (i32, i32) {
    %c0_i32 = arith.constant 0 : i32
    %c0_i32_0 = arith.constant 0 : i32
    %c0_i32_1 = arith.constant 0 : i32
    return %c0_i32, %c0_i32_0 : i32, i32
  }
  func.func @transform_8(%arg0: i32) -> (i32, i32) {
    %c0_i32 = arith.constant 0 : i32
    %c0_i32_0 = arith.constant 0 : i32
    %c0_i32_1 = arith.constant 0 : i32
    return %c0_i32, %c0_i32_0 : i32, i32
  }
  func.func @transform_9(%arg0: i32) -> (i32, i32) {
    %c0_i32 = arith.constant 0 : i32
    %c0_i32_0 = arith.constant 0 : i32
    %c0_i32_1 = arith.constant 0 : i32
    return %c0_i32, %c0_i32_0 : i32, i32
  }
  func.func @transform_10(%arg0: i32) -> (i32, i32) {
    %c0_i32 = arith.constant 0 : i32
    %c0_i32_0 = arith.constant 0 : i32
    %c0_i32_1 = arith.constant 0 : i32
    return %c0_i32, %c0_i32_0 : i32, i32
  }
  func.func @transform_11(%arg0: i32) -> (i32, i32) {
    %c0_i32 = arith.constant 0 : i32
    %c0_i32_0 = arith.constant 0 : i32
    %c0_i32_1 = arith.constant 0 : i32
    return %c0_i32, %c0_i32_0 : i32, i32
  }
  func.func @transform_12(%arg0: i32) -> (i32, i32) {
    %c0_i32 = arith.constant 0 : i32
    %c0_i32_0 = arith.constant 0 : i32
    %c0_i32_1 = arith.constant 0 : i32
    return %c0_i32, %c0_i32_0 : i32, i32
  }
  func.func @transform_13(%arg0: i32) -> (i32, i32) {
    %c0_i32 = arith.constant 0 : i32
    %c0_i32_0 = arith.constant 0 : i32
    %c0_i32_1 = arith.constant 0 : i32
    return %c0_i32, %c0_i32_0 : i32, i32
  }
  func.func @transform_14(%arg0: i32) -> (i32, i32) {
    %c0_i32 = arith.constant 0 : i32
    %c0_i32_0 = arith.constant 0 : i32
    %c0_i32_1 = arith.constant 0 : i32
    return %c0_i32, %c0_i32_0 : i32, i32
  }
  func.func @transform_15(%arg0: i32) -> (i32, i32) {
    %c0_i32 = arith.constant 0 : i32
    %c0_i32_0 = arith.constant 0 : i32
    %c0_i32_1 = arith.constant 0 : i32
    return %c0_i32, %c0_i32_0 : i32, i32
  }
  func.func @transform_16(%arg0: i32) -> (i32, i32) {
    %c0_i32 = arith.constant 0 : i32
    %c0_i32_0 = arith.constant 0 : i32
    %c0_i32_1 = arith.constant 0 : i32
    return %c0_i32, %c0_i32_0 : i32, i32
  }
  func.func @transform_17(%arg0: i32) -> (i32, i32) {
    %c0_i32 = arith.constant 0 : i32
    %c0_i32_0 = arith.constant 0 : i32
    return %arg0, %c0_i32 : i32, i32
  }
}

</mosaic_0001>

<llo_original>
// kernel: tpu_custom_call.1
$region0: #{tpu_custom_call.1}
  #allocation0 [shape = 'u32[]', space=smem, size = 0x4, offset = 0x4, fixed_abs, tag = 'smem constant byte address 0x4 - core index']
  #allocation1 [shape = 'u32[144,128]{1,0:T(1,128)}', space=vmem, size = 0x12000, scoped, tag = 'internal scratch']
  #allocation2 [shape = 'f32[1,1]{1,0:T(1,128)S(6)}', space=smem, size = 0x200, scoped, tag = 'scoped memory for tpu_custom_call.1']
  #allocation3 [shape = 'f32[1,1]{1,0:T(1,128)S(6)}', space=smem, size = 0x200, scoped, tag = 'scoped memory for tpu_custom_call.1']
  %s0 = inlined_call_operand.vmem [shape: f32[2,32], index: 0, kind: input, shape index: {}]
  %s1 = inlined_call_operand.hbm [shape: f32[2,8,32], index: 1, kind: input, shape index: {}]
  %s2 = inlined_call_operand.hbm [shape: f32[32,128], index: 2, kind: input, shape index: {}]
  %s3 = inlined_call_operand.hbm [shape: f32[32,128], index: 3, kind: input, shape index: {}]
  %s4 = inlined_call_operand.hbm [shape: f32[32,128], index: 4, kind: input, shape index: {}]
  %s5 = inlined_call_operand.vmem [shape: f32[1,128], index: 5, kind: input, shape index: {}]
  %s6 = inlined_call_operand.hbm [shape: f32[128,128], index: 6, kind: input, shape index: {}]
  %s7 = inlined_call_operand.vmem [shape: f32[1,128], index: 7, kind: input, shape index: {}]
  %s8 = inlined_call_operand.vmem [shape: f32[1,128], index: 8, kind: input, shape index: {}]
  %s9 = inlined_call_operand.hbm [shape: f32[32,128], index: 9, kind: input, shape index: {}]
  %s10 = inlined_call_operand.hbm [shape: f32[32,128], index: 10, kind: input, shape index: {}]
  %s11 = inlined_call_operand.vmem [shape: f32[1,128], index: 11, kind: input, shape index: {}]
  %s12 = inlined_call_operand.hbm [shape: f32[128,128], index: 12, kind: input, shape index: {}]
  %s13 = inlined_call_operand.vmem [shape: f32[1,128], index: 13, kind: input, shape index: {}]
  %s14 = inlined_call_operand.vmem [shape: f32[1,128], index: 14, kind: input, shape index: {}]
  %s15 = inlined_call_operand.<no memory space> [shape: f32[1,1], index: 15, kind: input, shape index: {}]
  %s16 = inlined_call_operand.<no memory space> [shape: f32[1,1], index: 16, kind: input, shape index: {}]
  %s17 = inlined_call_operand.vmem [shape: f32[2,1], index: 17, kind: output, shape index: {}]
  %s18 = sld [smem:[#allocation0]]
  $region110: #{tpu_custom_call.1} parent=0
    _
  %s20 = ssub.s32 1, %s18
  %s21 = scalar_select 0, %s20, %s18
  %22 = sst [smem:[#allocation2]] %s15
  %23 = sst [smem:[#allocation3]] %s16
  $region1: #{tpu_custom_call.1} parent=0
    #allocation4 [shape = 'u8[8192]{0}', space=vmem, size = 0x2000, scoped, tag = 'input window, operand 1, single buffered']
    #allocation5 [shape = 's32[1]{0}', space=sflag, size = 0x4, scoped, tag = 'scoped memory for tpu_custom_call.1']
    #allocation6 [shape = 'u8[16384]{0}', space=vmem, size = 0x4000, scoped, tag = 'input window, operand 2, single buffered']
    #allocation7 [shape = 's32[1]{0}', space=sflag, size = 0x4, scoped, tag = 'scoped memory for tpu_custom_call.1']
    #allocation8 [shape = 'u8[16384]{0}', space=vmem, size = 0x4000, scoped, tag = 'input window, operand 3, single buffered']
    #allocation9 [shape = 'u8[16384]{0}', space=vmem, size = 0x4000, scoped, tag = 'input window, operand 4, single buffered']
    #allocation10 [shape = 's32[1]{0}', space=sflag, size = 0x4, scoped, tag = 'scoped memory for tpu_custom_call.1']
    #allocation11 [shape = 'u8[65536]{0}', space=vmem, size = 0x10000, scoped, tag = 'input window, operand 6, single buffered']
    #allocation12 [shape = 'u8[16384]{0}', space=vmem, size = 0x4000, scoped, tag = 'input window, operand 9, single buffered']
    #allocation13 [shape = 's32[1]{0}', space=sflag, size = 0x4, scoped, tag = 'scoped memory for tpu_custom_call.1']
    #allocation14 [shape = 'u8[16384]{0}', space=vmem, size = 0x4000, scoped, tag = 'input window, operand 10, single buffered']
    #allocation15 [shape = 'u8[65536]{0}', space=vmem, size = 0x10000, scoped, tag = 'input window, operand 12, single buffered']
    #allocation16 [shape = 's32[1]{0}', space=sflag, size = 0x4, scoped, tag = 'scoped memory for tpu_custom_call.1']
    %24 = vsyncpa [#allocation5], 0
    %25 = vsyncpa [#allocation7], 0
    %26 = vsyncpa [#allocation10], 0
    %27 = vsyncpa [#allocation13], 0
    %28 = vsyncpa [#allocation16], 0
    // Predicated region
    $region2: #{tpu_custom_call.1} parent=1 // pred_check
      _
    $region3: #{tpu_custom_call.1} parent=1 // pred_check_branch
      %30 = sbr.rel (0) target = $region5
    $region4: #{tpu_custom_call.1} parent=1 // pred_region
      _
    $region5: #{tpu_custom_call.1} parent=1 // pred_fallthru
      _
    // Predicated region
    $region6: #{tpu_custom_call.1} parent=1 // pred_check
      _
    $region7: #{tpu_custom_call.1} parent=1 // pred_check_branch
      %32 = sbr.rel (0) target = $region9
    $region8: #{tpu_custom_call.1} parent=1 // pred_region
      %s34 = ssub.s32 256, 256
      %35 = vsyncadd [#allocation5], %s34
      %s36 = sshll.u32 [#allocation4], 4
      %s37 = int_to_ptr.vmem [resolvable:$true] %s36
      %42 = dma.hbm_to_vmem [thread:$0]  %s1, 256, %s37, [#allocation5], 128, 128, 8
    $region9: #{tpu_custom_call.1} parent=1 // pred_fallthru
      _
    // Predicated region
    $region10: #{tpu_custom_call.1} parent=1 // pred_check
      _
    $region11: #{tpu_custom_call.1} parent=1 // pred_check_branch
      %44 = sbr.rel (0) target = $region13
    $region12: #{tpu_custom_call.1} parent=1 // pred_region
      %s46 = ssub.s32 512, 512
      %47 = vsyncadd [#allocation7], %s46
      %s48 = sshll.u32 [#allocation6], 4
      %s49 = int_to_ptr.vmem [resolvable:$true] %s48
      %54 = dma.hbm_to_vmem [thread:$0]  %s2, 512, %s49, [#allocation7], 128, 128, 8
    $region13: #{tpu_custom_call.1} parent=1 // pred_fallthru
      _
    // Predicated region
    $region14: #{tpu_custom_call.1} parent=1 // pred_check
      _
    $region15: #{tpu_custom_call.1} parent=1 // pred_check_branch
      %56 = sbr.rel (0) target = $region17
    $region16: #{tpu_custom_call.1} parent=1 // pred_region
      %s58 = ssub.s32 512, 512
      %59 = vsyncadd [#allocation7], %s58
      %s60 = sshll.u32 [#allocation8], 4
      %s61 = int_to_ptr.vmem [resolvable:$true] %s60
      %66 = dma.hbm_to_vmem [thread:$0]  %s3, 512, %s61, [#allocation7], 128, 128, 8
    $region17: #{tpu_custom_call.1} parent=1 // pred_fallthru
      _
    // Predicated region
    $region18: #{tpu_custom_call.1} parent=1 // pred_check
      _
    $region19: #{tpu_custom_call.1} parent=1 // pred_check_branch
      %68 = sbr.rel (0) target = $region21
    $region20: #{tpu_custom_call.1} parent=1 // pred_region
      %s70 = ssub.s32 512, 512
      %71 = vsyncadd [#allocation10], %s70
      %s72 = sshll.u32 [#allocation9], 4
      %s73 = int_to_ptr.vmem [resolvable:$true] %s72
      %78 = dma.hbm_to_vmem [thread:$0]  %s4, 512, %s73, [#allocation10], 128, 128, 8
    $region21: #{tpu_custom_call.1} parent=1 // pred_fallthru
      _
    // Predicated region
    $region22: #{tpu_custom_call.1} parent=1 // pred_check
      _
    $region23: #{tpu_custom_call.1} parent=1 // pred_check_branch
      %80 = sbr.rel (0) target = $region25
    $region24: #{tpu_custom_call.1} parent=1 // pred_region
      _
    $region25: #{tpu_custom_call.1} parent=1 // pred_fallthru
      _
    // Predicated region
    $region26: #{tpu_custom_call.1} parent=1 // pred_check
      _
    $region27: #{tpu_custom_call.1} parent=1 // pred_check_branch
      %82 = sbr.rel (0) target = $region29
    $region28: #{tpu_custom_call.1} parent=1 // pred_region
      %s84 = ssub.s32 2048, 2048
      %85 = vsyncadd [#allocation10], %s84
      %s86 = sshll.u32 [#allocation11], 4
      %s87 = int_to_ptr.vmem [resolvable:$true] %s86
      %92 = dma.hbm_to_vmem [thread:$0]  %s6, 2048, %s87, [#allocation10], 128, 128, 8
    $region29: #{tpu_custom_call.1} parent=1 // pred_fallthru
      _
    // Predicated region
    $region30: #{tpu_custom_call.1} parent=1 // pred_check
      _
    $region31: #{tpu_custom_call.1} parent=1 // pred_check_branch
      %94 = sbr.rel (0) target = $region33
    $region32: #{tpu_custom_call.1} parent=1 // pred_region
      _
    $region33: #{tpu_custom_call.1} parent=1 // pred_fallthru
      _
    // Predicated region
    $region34: #{tpu_custom_call.1} parent=1 // pred_check
      _
    $region35: #{tpu_custom_call.1} parent=1 // pred_check_branch
      %96 = sbr.rel (0) target = $region37
    $region36: #{tpu_custom_call.1} parent=1 // pred_region
      _
    $region37: #{tpu_custom_call.1} parent=1 // pred_fallthru
      _
    // Predicated region
    $region38: #{tpu_custom_call.1} parent=1 // pred_check
      _
    $region39: #{tpu_custom_call.1} parent=1 // pred_check_branch
      %98 = sbr.rel (0) target = $region41
    $region40: #{tpu_custom_call.1} parent=1 // pred_region
      %s100 = ssub.s32 512, 512
      %101 = vsyncadd [#allocation13], %s100
      %s102 = sshll.u32 [#allocation12], 4
      %s103 = int_to_ptr.vmem [resolvable:$true] %s102
      %108 = dma.hbm_to_vmem [thread:$0]  %s9, 512, %s103, [#allocation13], 128, 128, 8
    $region41: #{tpu_custom_call.1} parent=1 // pred_fallthru
      _
    // Predicated region
    $region42: #{tpu_custom_call.1} parent=1 // pred_check
      _
    $region43: #{tpu_custom_call.1} parent=1 // pred_check_branch
      %110 = sbr.rel (0) target = $region45
    $region44: #{tpu_custom_call.1} parent=1 // pred_region
      %s112 = ssub.s32 512, 512
      %113 = vsyncadd [#allocation13], %s112
      %s114 = sshll.u32 [#allocation14], 4
      %s115 = int_to_ptr.vmem [resolvable:$true] %s114
      %120 = dma.hbm_to_vmem [thread:$0]  %s10, 512, %s115, [#allocation13], 128, 128, 8
    $region45: #{tpu_custom_call.1} parent=1 // pred_fallthru
      _
    // Predicated region
    $region46: #{tpu_custom_call.1} parent=1 // pred_check
      _
    $region47: #{tpu_custom_call.1} parent=1 // pred_check_branch
      %122 = sbr.rel (0) target = $region49
    $region48: #{tpu_custom_call.1} parent=1 // pred_region
      _
    $region49: #{tpu_custom_call.1} parent=1 // pred_fallthru
      _
    // Predicated region
    $region50: #{tpu_custom_call.1} parent=1 // pred_check
      _
    $region51: #{tpu_custom_call.1} parent=1 // pred_check_branch
      %124 = sbr.rel (0) target = $region53
    $region52: #{tpu_custom_call.1} parent=1 // pred_region
      %s126 = ssub.s32 2048, 2048
      %127 = vsyncadd [#allocation16], %s126
      %s128 = sshll.u32 [#allocation15], 4
      %s129 = int_to_ptr.vmem [resolvable:$true] %s128
      %134 = dma.hbm_to_vmem [thread:$0]  %s12, 2048, %s129, [#allocation16], 128, 128, 8
    $region53: #{tpu_custom_call.1} parent=1 // pred_fallthru
      _
    // Predicated region
    $region54: #{tpu_custom_call.1} parent=1 // pred_check
      _
    $region55: #{tpu_custom_call.1} parent=1 // pred_check_branch
      %136 = sbr.rel (0) target = $region57
    $region56: #{tpu_custom_call.1} parent=1 // pred_region
      _
    $region57: #{tpu_custom_call.1} parent=1 // pred_fallthru
      _
    // Predicated region
    $region58: #{tpu_custom_call.1} parent=1 // pred_check
      _
    $region59: #{tpu_custom_call.1} parent=1 // pred_check_branch
      %138 = sbr.rel (0) target = $region61
    $region60: #{tpu_custom_call.1} parent=1 // pred_region
      _
    $region61: #{tpu_custom_call.1} parent=1 // pred_fallthru
      _
    // Predicated region
    $region62: #{tpu_custom_call.1} parent=1 // pred_check
      _
    $region63: #{tpu_custom_call.1} parent=1 // pred_check_branch
      %140 = sbr.rel (0) target = $region65
    $region64: #{tpu_custom_call.1} parent=1 // pred_region
      _
    $region65: #{tpu_custom_call.1} parent=1 // pred_fallthru
      _
    // Predicated region
    $region66: #{tpu_custom_call.1} parent=1 // pred_check
      _
    $region67: #{tpu_custom_call.1} parent=1 // pred_check_branch
      %142 = sbr.rel (0) target = $region69
    $region68: #{tpu_custom_call.1} parent=1 // pred_region
      _
    $region69: #{tpu_custom_call.1} parent=1 // pred_fallthru
      _
    // Predicated region
    $region70: #{tpu_custom_call.1} parent=1 // pred_check
      _
    $region71: #{tpu_custom_call.1} parent=1 // pred_check_branch
      %144 = sbr.rel (0) target = $region73
    $region72: #{tpu_custom_call.1} parent=1 // pred_region
      %145 = dma.done [#allocation5], 256
    $region73: #{tpu_custom_call.1} parent=1 // pred_fallthru
      _
    // Predicated region
    $region74: #{tpu_custom_call.1} parent=1 // pred_check
      _
    $region75: #{tpu_custom_call.1} parent=1 // pred_check_branch
      %147 = sbr.rel (0) target = $region77
    $region76: #{tpu_custom_call.1} parent=1 // pred_region
      %148 = dma.done [#allocation7], 512
    $region77: #{tpu_custom_call.1} parent=1 // pred_fallthru
      _
    // Predicated region
    $region78: #{tpu_custom_call.1} parent=1 // pred_check
      _
    $region79: #{tpu_custom_call.1} parent=1 // pred_check_branch
      %150 = sbr.rel (0) target = $region81
    $region80: #{tpu_custom_call.1} parent=1 // pred_region
      %151 = dma.done [#allocation7], 512
    $region81: #{tpu_custom_call.1} parent=1 // pred_fallthru
      _
    // Predicated region
    $region82: #{tpu_custom_call.1} parent=1 // pred_check
      _
    $region83: #{tpu_custom_call.1} parent=1 // pred_check_branch
      %153 = sbr.rel (0) target = $region85
    $region84: #{tpu_custom_call.1} parent=1 // pred_region
      %154 = dma.done [#allocation10], 512
    $region85: #{tpu_custom_call.1} parent=1 // pred_fallthru
      _
    // Predicated region
    $region86: #{tpu_custom_call.1} parent=1 // pred_check
      _
    $region87: #{tpu_custom_call.1} parent=1 // pred_check_branch
      %156 = sbr.rel (0) target = $region89
    $region88: #{tpu_custom_call.1} parent=1 // pred_region
      %157 = dma.done [#allocation10], 2048
    $region89: #{tpu_custom_call.1} parent=1 // pred_fallthru
      _
    // Predicated region
    $region90: #{tpu_custom_call.1} parent=1 // pred_check
      _
    $region91: #{tpu_custom_call.1} parent=1 // pred_check_branch
      %159 = sbr.rel (0) target = $region93
    $region92: #{tpu_custom_call.1} parent=1 // pred_region
      %160 = dma.done [#allocation13], 512
    $region93: #{tpu_custom_call.1} parent=1 // pred_fallthru
      _
    // Predicated region
    $region94: #{tpu_custom_call.1} parent=1 // pred_check
      _
    $region95: #{tpu_custom_call.1} parent=1 // pred_check_branch
      %162 = sbr.rel (0) target = $region97
    $region96: #{tpu_custom_call.1} parent=1 // pred_region
      %163 = dma.done [#allocation13], 512
    $region97: #{tpu_custom_call.1} parent=1 // pred_fallthru
      _
    // Predicated region
    $region98: #{tpu_custom_call.1} parent=1 // pred_check
      _
    $region99: #{tpu_custom_call.1} parent=1 // pred_check_branch
      %165 = sbr.rel (0) target = $region101
    $region100: #{tpu_custom_call.1} parent=1 // pred_region
      %166 = dma.done [#allocation16], 2048
    $region101: #{tpu_custom_call.1} parent=1 // pred_fallthru
      _
    %v167 = vld [vmem:[%s0] sm:$0x3]
    %v168 = vld [vmem:[#allocation4] sm:$0xff]
    %v169 = vld [vmem:[#allocation4 + $0x8] sm:$0xff]
    %v172 = vunpack.c.l.s4 1966171168
    %v173 = vunpack.c.0.s8 %v172
    %v174 = vlaneseq
    %v175 = vshrl.u32 %v174, 7
    %v176 = vsub.s32 %v173, %v175
    %v177 = vrot.slane %v167, %v176
    %v178 = vcombine.high %v177, %v177
    %v180 = vunpack.c.l.s4 1966171168
    %v181 = vunpack.c.0.s8 %v180
    %v182 = vlaneseq
    %v183 = vshrl.u32 %v182, 7
    %v184 = vsub.s32 %v181, %v183
    %v185 = vrot.slane %v177, %v184
    %v187 = vunpack.c.l.s4 1966171168
    %v188 = vunpack.c.0.s8 %v187
    %v189 = vlaneseq
    %v190 = vshrl.u32 %v189, 7
    %v191 = vsub.s32 %v188, %v190
    %v192 = vrot.slane %v178, %v191
    %v193 = vlaneseq
    %v194 = vshrl.u32 %v193, 7
    %v195 = vsub.s32 0, %v194
    %v196 = vrot.slane %v185, %v195
    %v197 = vlaneseq
    %v198 = vshrl.u32 %v197, 7
    %v199 = vsub.s32 0, %v198
    %v200 = vrot.slane %v192, %v199
    %v203 = vmul.f32 %v168, %v196
    %v204 = vmul.f32 %v169, %v200
    %v205 = vld [vmem:[#allocation6] sm:$0xff]
    %v206 = vld [vmem:[#allocation6 + $0x8] sm:$0xff]
    %v207 = vld [vmem:[#allocation6 + $0x10] sm:$0xff]
    %v208 = vld [vmem:[#allocation6 + $0x18] sm:$0xff]
    %vm209 = vcmask 261120
    %v210 = vsel %vm209, %v167, 0
    %212 = vmatprep.subr.mxu0 0.0
    %213 = vmatpush1.msra.mxu0 0.0
    %214 = vmatprep.subr.mxu0 0.0
    %215 = vmatpush1.msra.mxu0 0.0
    %216 = vmatprep.subr.mxu0 0.0
    %217 = vmatpush1.msra.mxu0 0.0
    %218 = vmatprep.subr.mxu0 0.0
    %219 = vmatpush1.msra.mxu0 0.0
    %220 = vmatprep.subr.mxu0 0.0
    %221 = vmatpush1.msra.mxu0 0.0
    %222 = vmatprep.subr.mxu0 0.0
    %223 = vmatpush1.msra.mxu0 0.0
    %224 = vmatprep.subr.mxu0 0.0
    %225 = vmatpush1.msra.mxu0 0.0
    %226 = vmatprep.subr.mxu0 0.0
    %227 = vmatpush1.msra.mxu0 0.0
    %228 = vmatprep.subr.mxu0 0.0
    %229 = vmatpush1.msra.mxu0 0.0
    %230 = vmatprep.subr.mxu0 0.0
    %231 = vmatpush1.msra.mxu0 0.0
    %232 = vmatprep.subr.mxu0 0.0
    %233 = vmatpush1.msra.mxu0 0.0
    %234 = vmatprep.subr.mxu0 0.0
    %235 = vmatpush1.msra.mxu0 0.0
    %236 = vmatprep.subr.mxu0 0.0
    %237 = vmatpush1.msra.mxu0 %v208
    %238 = vmatprep.subr.mxu0 0.0
    %239 = vmatpush1.msra.mxu0 %v207
    %240 = vmatprep.subr.mxu0 0.0
    %241 = vmatpush1.msra.mxu0 %v206
    %242 = vmatprep.subr.mxu0 0.0
    %243 = vmatpush1.msra.mxu0 %v205
    %244 = vmatprep.subr.mxu0 0.0
    %245 = vmatpush2.msra.mxu0 0.0
    %246 = vmatprep.subr.mxu0 0.0
    %247 = vmatpush2.msra.mxu0 0.0
    %248 = vmatprep.subr.mxu0 0.0
    %249 = vmatpush2.msra.mxu0 0.0
    %250 = vmatprep.subr.mxu0 0.0
    %251 = vmatpush2.msra.mxu0 0.0
    %252 = vmatprep.subr.mxu0 0.0
    %253 = vmatpush2.msra.mxu0 0.0
    %254 = vmatprep.subr.mxu0 0.0
    %255 = vmatpush2.msra.mxu0 0.0
    %256 = vmatprep.subr.mxu0 0.0
    %257 = vmatpush2.msra.mxu0 0.0
    %258 = vmatprep.subr.mxu0 0.0
    %259 = vmatpush2.msra.mxu0 0.0
    %260 = vmatprep.subr.mxu0 0.0
    %261 = vmatpush2.msra.mxu0 0.0
    %262 = vmatprep.subr.mxu0 0.0
    %263 = vmatpush2.msra.mxu0 0.0
    %264 = vmatprep.subr.mxu0 0.0
    %265 = vmatpush2.msra.mxu0 0.0
    %266 = vmatprep.subr.mxu0 0.0
    %267 = vmatpush2.msra.mxu0 0.0
    %268 = vmatprep.subr.mxu0 0.0
    %269 = vmatpush2.msra.mxu0 0.0
    %270 = vmatprep.subr.mxu0 0.0
    %271 = vmatpush2.msra.mxu0 0.0
    %272 = vmatprep.subr.mxu0 0.0
    %273 = vmatpush2.msra.mxu0 0.0
    %274 = vmatprep.subr.mxu0 0.0
    %275 = vmatpush2.msra.mxu0 0.0
    %276 = vmatprep.mubr.f32.mxu0 0.0
    %277 = vmatmul.mubr.f32.gmra.mxu0 %v210
    %v278 = vpop.f32.mrf.mxu0
    %v279 = vadd.f32 0.0, %v278
    %v280 = vpop.f32.mrf.mxu0
    %281 = vdwg.mxu0
    %v282 = vld [vmem:[#allocation8] sm:$0xff]
    %v283 = vld [vmem:[#allocation8 + $0x8] sm:$0xff]
    %v284 = vld [vmem:[#allocation8 + $0x10] sm:$0xff]
    %v285 = vld [vmem:[#allocation8 + $0x18] sm:$0xff]
    %v286 = vld [vmem:[#allocation9] sm:$0xff]
    %v287 = vld [vmem:[#allocation9 + $0x8] sm:$0xff]
    %v288 = vld [vmem:[#allocation9 + $0x10] sm:$0xff]
    %v289 = vld [vmem:[#allocation9 + $0x18] sm:$0xff]
    %v291 = vsel %vm209, %v203, 0
    %v294 = vsel %vm209, %v204, 0
    %296 = vmatprep.subr.mxu0 0.0
    %297 = vmatpush1.msra.mxu0 0.0
    %298 = vmatprep.subr.mxu0 0.0
    %299 = vmatpush1.msra.mxu0 0.0
    %300 = vmatprep.subr.mxu0 0.0
    %301 = vmatpush1.msra.mxu0 0.0
    %302 = vmatprep.subr.mxu0 0.0
    %303 = vmatpush1.msra.mxu0 0.0
    %304 = vmatprep.subr.mxu0 0.0
    %305 = vmatpush1.msra.mxu0 0.0
    %306 = vmatprep.subr.mxu0 0.0
    %307 = vmatpush1.msra.mxu0 0.0
    %308 = vmatprep.subr.mxu0 0.0
    %309 = vmatpush1.msra.mxu0 0.0
    %310 = vmatprep.subr.mxu0 0.0
    %311 = vmatpush1.msra.mxu0 0.0
    %312 = vmatprep.subr.mxu0 0.0
    %313 = vmatpush1.msra.mxu0 0.0
    %314 = vmatprep.subr.mxu0 0.0
    %315 = vmatpush1.msra.mxu0 0.0
    %316 = vmatprep.subr.mxu0 0.0
    %317 = vmatpush1.msra.mxu0 0.0
    %318 = vmatprep.subr.mxu0 0.0
    %319 = vmatpush1.msra.mxu0 0.0
    %320 = vmatprep.subr.mxu0 0.0
    %321 = vmatpush1.msra.mxu0 %v289
    %322 = vmatprep.subr.mxu0 0.0
    %323 = vmatpush1.msra.mxu0 %v288
    %324 = vmatprep.subr.mxu0 0.0
    %325 = vmatpush1.msra.mxu0 %v287
    %326 = vmatprep.subr.mxu0 0.0
    %327 = vmatpush1.msra.mxu0 %v286
    %328 = vmatprep.subr.mxu0 0.0
    %329 = vmatpush2.msra.mxu0 0.0
    %330 = vmatprep.subr.mxu0 0.0
    %331 = vmatpush2.msra.mxu0 0.0
    %332 = vmatprep.subr.mxu0 0.0
    %333 = vmatpush2.msra.mxu0 0.0
    %334 = vmatprep.subr.mxu0 0.0
    %335 = vmatpush2.msra.mxu0 0.0
    %336 = vmatprep.subr.mxu0 0.0
    %337 = vmatpush2.msra.mxu0 0.0
    %338 = vmatprep.subr.mxu0 0.0
    %339 = vmatpush2.msra.mxu0 0.0
    %340 = vmatprep.subr.mxu0 0.0
    %341 = vmatpush2.msra.mxu0 0.0
    %342 = vmatprep.subr.mxu0 0.0
    %343 = vmatpush2.msra.mxu0 0.0
    %344 = vmatprep.subr.mxu0 0.0
    %345 = vmatpush2.msra.mxu0 0.0
    %346 = vmatprep.subr.mxu0 0.0
    %347 = vmatpush2.msra.mxu0 0.0
    %348 = vmatprep.subr.mxu0 0.0
    %349 = vmatpush2.msra.mxu0 0.0
    %350 = vmatprep.subr.mxu0 0.0
    %351 = vmatpush2.msra.mxu0 0.0
    %352 = vmatprep.subr.mxu0 0.0
    %353 = vmatpush2.msra.mxu0 0.0
    %354 = vmatprep.subr.mxu0 0.0
    %355 = vmatpush2.msra.mxu0 0.0
    %356 = vmatprep.subr.mxu0 0.0
    %357 = vmatpush2.msra.mxu0 0.0
    %358 = vmatprep.subr.mxu0 0.0
    %359 = vmatpush2.msra.mxu0 0.0
    %360 = vmatprep.mubr.f32.mxu0 0.0
    %361 = vmatmul.mubr.f32.gmra.mxu0 %v291
    %v362 = vpop.f32.mrf.mxu0
    %v363 = vadd.f32 0.0, %v362
    %v364 = vpop.f32.mrf.mxu0
    %365 = vmatprep.mubr.f32.mxu0 0.0
    %366 = vmatmul.mubr.f32.gmra.mxu0 %v294
    %v367 = vpop.f32.mrf.mxu0
    %v368 = vadd.f32 0.0, %v367
    %v369 = vpop.f32.mrf.mxu0
    %370 = vdwg.mxu0
    %v372 = vsel %vm209, %v168, 0
    %v375 = vsel %vm209, %v169, 0
    %377 = vmatprep.subr.mxu0 0.0
    %378 = vmatpush1.msra.mxu0 0.0
    %379 = vmatprep.subr.mxu0 0.0
    %380 = vmatpush1.msra.mxu0 0.0
    %381 = vmatprep.subr.mxu0 0.0
    %382 = vmatpush1.msra.mxu0 0.0
    %383 = vmatprep.subr.mxu0 0.0
    %384 = vmatpush1.msra.mxu0 0.0
    %385 = vmatprep.subr.mxu0 0.0
    %386 = vmatpush1.msra.mxu0 0.0
    %387 = vmatprep.subr.mxu0 0.0
    %388 = vmatpush1.msra.mxu0 0.0
    %389 = vmatprep.subr.mxu0 0.0
    %390 = vmatpush1.msra.mxu0 0.0
    %391 = vmatprep.subr.mxu0 0.0
    %392 = vmatpush1.msra.mxu0 0.0
    %393 = vmatprep.subr.mxu0 0.0
    %394 = vmatpush1.msra.mxu0 0.0
    %395 = vmatprep.subr.mxu0 0.0
    %396 = vmatpush1.msra.mxu0 0.0
    %397 = vmatprep.subr.mxu0 0.0
    %398 = vmatpush1.msra.mxu0 0.0
    %399 = vmatprep.subr.mxu0 0.0
    %400 = vmatpush1.msra.mxu0 0.0
    %401 = vmatprep.subr.mxu0 0.0
    %402 = vmatpush1.msra.mxu0 %v285
    %403 = vmatprep.subr.mxu0 0.0
    %404 = vmatpush1.msra.mxu0 %v284
    %405 = vmatprep.subr.mxu0 0.0
    %406 = vmatpush1.msra.mxu0 %v283
    %407 = vmatprep.subr.mxu0 0.0
    %408 = vmatpush1.msra.mxu0 %v282
    %409 = vmatprep.subr.mxu0 0.0
    %410 = vmatpush2.msra.mxu0 0.0
    %411 = vmatprep.subr.mxu0 0.0
    %412 = vmatpush2.msra.mxu0 0.0
    %413 = vmatprep.subr.mxu0 0.0
    %414 = vmatpush2.msra.mxu0 0.0
    %415 = vmatprep.subr.mxu0 0.0
    %416 = vmatpush2.msra.mxu0 0.0
    %417 = vmatprep.subr.mxu0 0.0
    %418 = vmatpush2.msra.mxu0 0.0
    %419 = vmatprep.subr.mxu0 0.0
    %420 = vmatpush2.msra.mxu0 0.0
    %421 = vmatprep.subr.mxu0 0.0
    %422 = vmatpush2.msra.mxu0 0.0
    %423 = vmatprep.subr.mxu0 0.0
    %424 = vmatpush2.msra.mxu0 0.0
    %425 = vmatprep.subr.mxu0 0.0
    %426 = vmatpush2.msra.mxu0 0.0
    %427 = vmatprep.subr.mxu0 0.0
    %428 = vmatpush2.msra.mxu0 0.0
    %429 = vmatprep.subr.mxu0 0.0
    %430 = vmatpush2.msra.mxu0 0.0
    %431 = vmatprep.subr.mxu0 0.0
    %432 = vmatpush2.msra.mxu0 0.0
    %433 = vmatprep.subr.mxu0 0.0
    %434 = vmatpush2.msra.mxu0 0.0
    %435 = vmatprep.subr.mxu0 0.0
    %436 = vmatpush2.msra.mxu0 0.0
    %437 = vmatprep.subr.mxu0 0.0
    %438 = vmatpush2.msra.mxu0 0.0
    %439 = vmatprep.subr.mxu0 0.0
    %440 = vmatpush2.msra.mxu0 0.0
    %441 = vmatprep.mubr.f32.mxu0 0.0
    %442 = vmatmul.mubr.f32.gmra.mxu0 %v372
    %v443 = vpop.f32.mrf.mxu0
    %v444 = vadd.f32 %v363, %v443
    %v445 = vpop.f32.mrf.mxu0
    %446 = vmatprep.mubr.f32.mxu0 0.0
    %447 = vmatmul.mubr.f32.gmra.mxu0 %v375
    %v448 = vpop.f32.mrf.mxu0
    %v449 = vadd.f32 %v368, %v448
    %v450 = vpop.f32.mrf.mxu0
    %451 = vdwg.mxu0
    %v454 = vunpack.c.l.s4 1966171168
    %v455 = vunpack.c.0.s8 %v454
    %v456 = vlaneseq
    %v457 = vshrl.u32 %v456, 7
    %v458 = vsub.s32 %v455, %v457
    %v459 = vrot.slane %v279, %v458
    %v460 = vcombine.high %v459, %v459
    %v462 = vunpack.c.l.s4 1966171168
    %v463 = vunpack.c.0.s8 %v462
    %v464 = vlaneseq
    %v465 = vshrl.u32 %v464, 7
    %v466 = vsub.s32 %v463, %v465
    %v467 = vrot.slane %v459, %v466
    %v469 = vunpack.c.l.s4 1966171168
    %v470 = vunpack.c.0.s8 %v469
    %v471 = vlaneseq
    %v472 = vshrl.u32 %v471, 7
    %v473 = vsub.s32 %v470, %v472
    %v474 = vrot.slane %v460, %v473
    %v475 = vlaneseq
    %v476 = vshrl.u32 %v475, 7
    %v477 = vsub.s32 0, %v476
    %v478 = vrot.slane %v467, %v477
    %v479 = vlaneseq
    %v480 = vshrl.u32 %v479, 7
    %v481 = vsub.s32 0, %v480
    %v482 = vrot.slane %v474, %v481
    %v485 = vadd.f32 %v444, %v478
    %v486 = vadd.f32 %v449, %v482
    %v487 = vld [vmem:[%s5] sm:$0x1]
    %v489 = vlaneseq
    %v490 = vshrl.u32 %v489, 7
    %v491 = vsub.s32 0, %v490
    %v492 = vrot.slane %v487, %v491
    %v494 = vadd.f32 %v485, %v492
    %v495 = vadd.f32 %v486, %v492
    %v496 = vmax.f32 %v494, 0.0
    %v497 = vmax.f32 %v495, 0.0
    %v498 = vld [vmem:[#allocation11] sm:$0xff]
    %v499 = vld [vmem:[#allocation11 + $0x8] sm:$0xff]
    %v500 = vld [vmem:[#allocation11 + $0x10] sm:$0xff]
    %v501 = vld [vmem:[#allocation11 + $0x18] sm:$0xff]
    %v502 = vld [vmem:[#allocation11 + $0x20] sm:$0xff]
    %v503 = vld [vmem:[#allocation11 + $0x28] sm:$0xff]
    %v504 = vld [vmem:[#allocation11 + $0x30] sm:$0xff]
    %v505 = vld [vmem:[#allocation11 + $0x38] sm:$0xff]
    %v506 = vld [vmem:[#allocation11 + $0x40] sm:$0xff]
    %v507 = vld [vmem:[#allocation11 + $0x48] sm:$0xff]
    %v508 = vld [vmem:[#allocation11 + $0x50] sm:$0xff]
    %v509 = vld [vmem:[#allocation11 + $0x58] sm:$0xff]
    %v510 = vld [vmem:[#allocation11 + $0x60] sm:$0xff]
    %v511 = vld [vmem:[#allocation11 + $0x68] sm:$0xff]
    %v512 = vld [vmem:[#allocation11 + $0x70] sm:$0xff]
    %v513 = vld [vmem:[#allocation11 + $0x78] sm:$0xff]
    %v514 = vld [vmem:[%s7] sm:$0x1]
    %v516 = vlaneseq
    %v517 = vshrl.u32 %v516, 7
    %v518 = vsub.s32 0, %v517
    %v519 = vrot.slane %v514, %v518
    %521 = vmatprep.subr.mxu0 0.0
    %522 = vmatpush1.msra.mxu0 %v513
    %523 = vmatprep.subr.mxu0 0.0
    %524 = vmatpush1.msra.mxu0 %v512
    %525 = vmatprep.subr.mxu0 0.0
    %526 = vmatpush1.msra.mxu0 %v511
    %527 = vmatprep.subr.mxu0 0.0
    %528 = vmatpush1.msra.mxu0 %v510
    %529 = vmatprep.subr.mxu0 0.0
    %530 = vmatpush1.msra.mxu0 %v509
    %531 = vmatprep.subr.mxu0 0.0
    %532 = vmatpush1.msra.mxu0 %v508
    %533 = vmatprep.subr.mxu0 0.0
    %534 = vmatpush1.msra.mxu0 %v507
    %535 = vmatprep.subr.mxu0 0.0
    %536 = vmatpush1.msra.mxu0 %v506
    %537 = vmatprep.subr.mxu0 0.0
    %538 = vmatpush1.msra.mxu0 %v505
    %539 = vmatprep.subr.mxu0 0.0
    %540 = vmatpush1.msra.mxu0 %v504
    %541 = vmatprep.subr.mxu0 0.0
    %542 = vmatpush1.msra.mxu0 %v503
    %543 = vmatprep.subr.mxu0 0.0
    %544 = vmatpush1.msra.mxu0 %v502
    %545 = vmatprep.subr.mxu0 0.0
    %546 = vmatpush1.msra.mxu0 %v501
    %547 = vmatprep.subr.mxu0 0.0
    %548 = vmatpush1.msra.mxu0 %v500
    %549 = vmatprep.subr.mxu0 0.0
    %550 = vmatpush1.msra.mxu0 %v499
    %551 = vmatprep.subr.mxu0 0.0
    %552 = vmatpush1.msra.mxu0 %v498
    %553 = vmatprep.subr.mxu0 0.0
    %554 = vmatpush2.msra.mxu0 0.0
    %555 = vmatprep.subr.mxu0 0.0
    %556 = vmatpush2.msra.mxu0 0.0
    %557 = vmatprep.subr.mxu0 0.0
    %558 = vmatpush2.msra.mxu0 0.0
    %559 = vmatprep.subr.mxu0 0.0
    %560 = vmatpush2.msra.mxu0 0.0
    %561 = vmatprep.subr.mxu0 0.0
    %562 = vmatpush2.msra.mxu0 0.0
    %563 = vmatprep.subr.mxu0 0.0
    %564 = vmatpush2.msra.mxu0 0.0
    %565 = vmatprep.subr.mxu0 0.0
    %566 = vmatpush2.msra.mxu0 0.0
    %567 = vmatprep.subr.mxu0 0.0
    %568 = vmatpush2.msra.mxu0 0.0
    %569 = vmatprep.subr.mxu0 0.0
    %570 = vmatpush2.msra.mxu0 0.0
    %571 = vmatprep.subr.mxu0 0.0
    %572 = vmatpush2.msra.mxu0 0.0
    %573 = vmatprep.subr.mxu0 0.0
    %574 = vmatpush2.msra.mxu0 0.0
    %575 = vmatprep.subr.mxu0 0.0
    %576 = vmatpush2.msra.mxu0 0.0
    %577 = vmatprep.subr.mxu0 0.0
    %578 = vmatpush2.msra.mxu0 0.0
    %579 = vmatprep.subr.mxu0 0.0
    %580 = vmatpush2.msra.mxu0 0.0
    %581 = vmatprep.subr.mxu0 0.0
    %582 = vmatpush2.msra.mxu0 0.0
    %583 = vmatprep.subr.mxu0 0.0
    %584 = vmatpush2.msra.mxu0 0.0
    %585 = vmatprep.mubr.f32.mxu0 0.0
    %586 = vmatmul.mubr.f32.gmra.mxu0 %v496
    %v587 = vpop.f32.mrf.mxu0
    %v588 = vadd.f32 %v519, %v587
    %v589 = vpop.f32.mrf.mxu0
    %590 = vmatprep.mubr.f32.mxu0 0.0
    %591 = vmatmul.mubr.f32.gmra.mxu0 %v497
    %v592 = vpop.f32.mrf.mxu0
    %v593 = vadd.f32 %v519, %v592
    %v594 = vpop.f32.mrf.mxu0
    %595 = vdwg.mxu0
    %v596 = vmax.f32 %v588, 0.0
    %v597 = vmax.f32 %v593, 0.0
    %v598 = vld [vmem:[%s8] sm:$0x1]
    %v600 = vlaneseq
    %v601 = vshrl.u32 %v600, 7
    %v602 = vsub.s32 0, %v601
    %v603 = vrot.slane %v598, %v602
    %v605 = vmul.f32 %v596, %v603
    %v606 = vmul.f32 %v597, %v603
    %607 = vadd.xlane.f32.xlu0 %v605
    %v608 = vpop.xlane.xlu0 %607
    %609 = vadd.xlane.f32.xlu0 %v606
    %v610 = vpop.xlane.xlu0 %609
    %s611 = sld [smem:[#allocation2]]
    %v612 = vstv %s611
    %v613 = vadd.f32 %v608, %v612
    %v614 = vadd.f32 %v610, %v612
    %v617 = vlaneseq
    %v618 = vand.u32 %v617, 127
    %v619 = vlaneseq
    %v620 = vshrl.u32 %v619, 7
    %v621 = vsub.s32 %v618, %v620
    %v622 = vrot.slane %v613, %v621
    %v623 = vlaneseq
    %v624 = vshrl.u32 %v623, 7
    %v625 = vsub.s32 %v618, %v624
    %v626 = vrot.slane %v614, %v625
    %vm627 = vcmask 1041409
    %v628 = vsel %vm627, %v626, %v622
    %vm630 = vcmask 58368
    %v631 = vsel %vm630, %v628, -inf
    %632 = vmax.xlane.f32.xlu0 %v631
    %v633 = vpop.xlane.xlu0 %632
    %v635 = vlaneseq
    %v636 = vshrl.u32 %v635, 7
    %v637 = vsub.s32 0, %v636
    %v638 = vrot.slane %v633, %v637
    %v639 = vlaneseq
    %v640 = vshrl.u32 %v639, 7
    %v641 = vsub.s32 1, %v640
    %v642 = vrot.slane %v633, %v641
    %v645 = vsub.f32 %v613, %v638
    %v646 = vsub.f32 %v614, %v642
    %v647 = vmul.f32 %v645, 1.442695
    %v648 = vpow.pop %v647
    %v649 = vmul.f32 %v646, 1.442695
    %v650 = vpow.pop %v649
    %653 = vset.pattern.permute.xlu0 0
    %654 = vperm.xlu0 %653, %v648
    %v655 = vpop.permute.xlu0 %654
    %656 = vset.pattern.permute.xlu0 0
    %657 = vperm.xlu0 %656, %v650
    %v658 = vpop.permute.xlu0 %657
    %v659 = vlaneseq
    %v660 = vshrl.u32 %v659, 7
    %v661 = vsub.s32 %v618, %v660
    %v662 = vrot.slane %v655, %v661
    %v663 = vlaneseq
    %v664 = vshrl.u32 %v663, 7
    %v665 = vsub.s32 %v618, %v664
    %v666 = vrot.slane %v658, %v665
    %v667 = vsel %vm627, %v666, %v662
    %v669 = vsel %vm630, %v667, 0.0
    %670 = vadd.xlane.f32.xlu0 %v669
    %v671 = vpop.xlane.xlu0 %670
    %v672 = vrcp.pop %v671
    %v674 = vlaneseq
    %v675 = vshrl.u32 %v674, 7
    %v676 = vsub.s32 0, %v675
    %v677 = vrot.slane %v672, %v676
    %v678 = vlaneseq
    %v679 = vshrl.u32 %v678, 7
    %v680 = vsub.s32 1, %v679
    %v681 = vrot.slane %v672, %v680
    %v684 = vmul.f32 %v648, %v677
    %v685 = vmul.f32 %v650, %v681
    %687 = vset.pattern.permute.xlu0 0
    %688 = vperm.xlu0 %687, %v684
    %v689 = vpop.permute.xlu0 %688
    %692 = vset.pattern.permute.xlu0 0
    %693 = vperm.xlu0 %692, %v685
    %v694 = vpop.permute.xlu0 %693
    %v696 = vmul.f32 %v689, %v168
    %v697 = vmul.f32 %v694, %v169
    %v698 = vsel %vm209, %v696, 0.0
    %v699 = vrot.slane %v698, 4
    %v700 = vadd.f32 %v698, %v699
    %v701 = vrot.slane %v700, 2
    %v702 = vadd.f32 %v700, %v701
    %v703 = vrot.slane %v702, 1
    %v704 = vadd.f32 %v702, %v703
    %v705 = vsel %vm209, %v697, 0.0
    %v706 = vrot.slane %v705, 4
    %v707 = vadd.f32 %v705, %v706
    %v708 = vrot.slane %v707, 2
    %v709 = vadd.f32 %v707, %v708
    %v710 = vrot.slane %v709, 1
    %v711 = vadd.f32 %v709, %v710
    %v712 = vld [vmem:[#allocation12] sm:$0xff]
    %v713 = vld [vmem:[#allocation12 + $0x8] sm:$0xff]
    %v714 = vld [vmem:[#allocation12 + $0x10] sm:$0xff]
    %v715 = vld [vmem:[#allocation12 + $0x18] sm:$0xff]
    %v716 = vld [vmem:[#allocation14] sm:$0xff]
    %v717 = vld [vmem:[#allocation14 + $0x8] sm:$0xff]
    %v718 = vld [vmem:[#allocation14 + $0x10] sm:$0xff]
    %v719 = vld [vmem:[#allocation14 + $0x18] sm:$0xff]
    %v722 = vsel %vm627, %v711, %v704
    %v723 = vsel %vm209, %v722, 0
    %725 = vmatprep.subr.mxu0 0.0
    %726 = vmatpush1.msra.mxu0 0.0
    %727 = vmatprep.subr.mxu0 0.0
    %728 = vmatpush1.msra.mxu0 0.0
    %729 = vmatprep.subr.mxu0 0.0
    %730 = vmatpush1.msra.mxu0 0.0
    %731 = vmatprep.subr.mxu0 0.0
    %732 = vmatpush1.msra.mxu0 0.0
    %733 = vmatprep.subr.mxu0 0.0
    %734 = vmatpush1.msra.mxu0 0.0
    %735 = vmatprep.subr.mxu0 0.0
    %736 = vmatpush1.msra.mxu0 0.0
    %737 = vmatprep.subr.mxu0 0.0
    %738 = vmatpush1.msra.mxu0 0.0
    %739 = vmatprep.subr.mxu0 0.0
    %740 = vmatpush1.msra.mxu0 0.0
    %741 = vmatprep.subr.mxu0 0.0
    %742 = vmatpush1.msra.mxu0 0.0
    %743 = vmatprep.subr.mxu0 0.0
    %744 = vmatpush1.msra.mxu0 0.0
    %745 = vmatprep.subr.mxu0 0.0
    %746 = vmatpush1.msra.mxu0 0.0
    %747 = vmatprep.subr.mxu0 0.0
    %748 = vmatpush1.msra.mxu0 0.0
    %749 = vmatprep.subr.mxu0 0.0
    %750 = vmatpush1.msra.mxu0 %v719
    %751 = vmatprep.subr.mxu0 0.0
    %752 = vmatpush1.msra.mxu0 %v718
    %753 = vmatprep.subr.mxu0 0.0
    %754 = vmatpush1.msra.mxu0 %v717
    %755 = vmatprep.subr.mxu0 0.0
    %756 = vmatpush1.msra.mxu0 %v716
    %757 = vmatprep.subr.mxu0 0.0
    %758 = vmatpush2.msra.mxu0 0.0
    %759 = vmatprep.subr.mxu0 0.0
    %760 = vmatpush2.msra.mxu0 0.0
    %761 = vmatprep.subr.mxu0 0.0
    %762 = vmatpush2.msra.mxu0 0.0
    %763 = vmatprep.subr.mxu0 0.0
    %764 = vmatpush2.msra.mxu0 0.0
    %765 = vmatprep.subr.mxu0 0.0
    %766 = vmatpush2.msra.mxu0 0.0
    %767 = vmatprep.subr.mxu0 0.0
    %768 = vmatpush2.msra.mxu0 0.0
    %769 = vmatprep.subr.mxu0 0.0
    %770 = vmatpush2.msra.mxu0 0.0
    %771 = vmatprep.subr.mxu0 0.0
    %772 = vmatpush2.msra.mxu0 0.0
    %773 = vmatprep.subr.mxu0 0.0
    %774 = vmatpush2.msra.mxu0 0.0
    %775 = vmatprep.subr.mxu0 0.0
    %776 = vmatpush2.msra.mxu0 0.0
    %777 = vmatprep.subr.mxu0 0.0
    %778 = vmatpush2.msra.mxu0 0.0
    %779 = vmatprep.subr.mxu0 0.0
    %780 = vmatpush2.msra.mxu0 0.0
    %781 = vmatprep.subr.mxu0 0.0
    %782 = vmatpush2.msra.mxu0 0.0
    %783 = vmatprep.subr.mxu0 0.0
    %784 = vmatpush2.msra.mxu0 0.0
    %785 = vmatprep.subr.mxu0 0.0
    %786 = vmatpush2.msra.mxu0 0.0
    %787 = vmatprep.subr.mxu0 0.0
    %788 = vmatpush2.msra.mxu0 0.0
    %789 = vmatprep.mubr.f32.mxu0 0.0
    %790 = vmatmul.mubr.f32.gmra.mxu0 %v723
    %v791 = vpop.f32.mrf.mxu0
    %v792 = vadd.f32 0.0, %v791
    %v793 = vpop.f32.mrf.mxu0
    %794 = vdwg.mxu0
    %795 = vmatprep.subr.mxu0 0.0
    %796 = vmatpush1.msra.mxu0 0.0
    %797 = vmatprep.subr.mxu0 0.0
    %798 = vmatpush1.msra.mxu0 0.0
    %799 = vmatprep.subr.mxu0 0.0
    %800 = vmatpush1.msra.mxu0 0.0
    %801 = vmatprep.subr.mxu0 0.0
    %802 = vmatpush1.msra.mxu0 0.0
    %803 = vmatprep.subr.mxu0 0.0
    %804 = vmatpush1.msra.mxu0 0.0
    %805 = vmatprep.subr.mxu0 0.0
    %806 = vmatpush1.msra.mxu0 0.0
    %807 = vmatprep.subr.mxu0 0.0
    %808 = vmatpush1.msra.mxu0 0.0
    %809 = vmatprep.subr.mxu0 0.0
    %810 = vmatpush1.msra.mxu0 0.0
    %811 = vmatprep.subr.mxu0 0.0
    %812 = vmatpush1.msra.mxu0 0.0
    %813 = vmatprep.subr.mxu0 0.0
    %814 = vmatpush1.msra.mxu0 0.0
    %815 = vmatprep.subr.mxu0 0.0
    %816 = vmatpush1.msra.mxu0 0.0
    %817 = vmatprep.subr.mxu0 0.0
    %818 = vmatpush1.msra.mxu0 0.0
    %819 = vmatprep.subr.mxu0 0.0
    %820 = vmatpush1.msra.mxu0 %v715
    %821 = vmatprep.subr.mxu0 0.0
    %822 = vmatpush1.msra.mxu0 %v714
    %823 = vmatprep.subr.mxu0 0.0
    %824 = vmatpush1.msra.mxu0 %v713
    %825 = vmatprep.subr.mxu0 0.0
    %826 = vmatpush1.msra.mxu0 %v712
    %827 = vmatprep.subr.mxu0 0.0
    %828 = vmatpush2.msra.mxu0 0.0
    %829 = vmatprep.subr.mxu0 0.0
    %830 = vmatpush2.msra.mxu0 0.0
    %831 = vmatprep.subr.mxu0 0.0
    %832 = vmatpush2.msra.mxu0 0.0
    %833 = vmatprep.subr.mxu0 0.0
    %834 = vmatpush2.msra.mxu0 0.0
    %835 = vmatprep.subr.mxu0 0.0
    %836 = vmatpush2.msra.mxu0 0.0
    %837 = vmatprep.subr.mxu0 0.0
    %838 = vmatpush2.msra.mxu0 0.0
    %839 = vmatprep.subr.mxu0 0.0
    %840 = vmatpush2.msra.mxu0 0.0
    %841 = vmatprep.subr.mxu0 0.0
    %842 = vmatpush2.msra.mxu0 0.0
    %843 = vmatprep.subr.mxu0 0.0
    %844 = vmatpush2.msra.mxu0 0.0
    %845 = vmatprep.subr.mxu0 0.0
    %846 = vmatpush2.msra.mxu0 0.0
    %847 = vmatprep.subr.mxu0 0.0
    %848 = vmatpush2.msra.mxu0 0.0
    %849 = vmatprep.subr.mxu0 0.0
    %850 = vmatpush2.msra.mxu0 0.0
    %851 = vmatprep.subr.mxu0 0.0
    %852 = vmatpush2.msra.mxu0 0.0
    %853 = vmatprep.subr.mxu0 0.0
    %854 = vmatpush2.msra.mxu0 0.0
    %855 = vmatprep.subr.mxu0 0.0
    %856 = vmatpush2.msra.mxu0 0.0
    %857 = vmatprep.subr.mxu0 0.0
    %858 = vmatpush2.msra.mxu0 0.0
    %859 = vmatprep.mubr.f32.mxu0 0.0
    %860 = vmatmul.mubr.f32.gmra.mxu0 %v210
    %v861 = vpop.f32.mrf.mxu0
    %v862 = vadd.f32 %v792, %v861
    %v863 = vpop.f32.mrf.mxu0
    %864 = vdwg.mxu0
    %v865 = vld [vmem:[%s11] sm:$0x1]
    %v867 = vlaneseq
    %v868 = vshrl.u32 %v867, 7
    %v869 = vsub.s32 0, %v868
    %v870 = vrot.slane %v865, %v869
    %v872 = vadd.f32 %v862, %v870
    %v873 = vmax.f32 %v872, 0.0
    %v874 = vld [vmem:[#allocation15] sm:$0xff]
    %v875 = vld [vmem:[#allocation15 + $0x8] sm:$0xff]
    %v876 = vld [vmem:[#allocation15 + $0x10] sm:$0xff]
    %v877 = vld [vmem:[#allocation15 + $0x18] sm:$0xff]
    %v878 = vld [vmem:[#allocation15 + $0x20] sm:$0xff]
    %v879 = vld [vmem:[#allocation15 + $0x28] sm:$0xff]
    %v880 = vld [vmem:[#allocation15 + $0x30] sm:$0xff]
    %v881 = vld [vmem:[#allocation15 + $0x38] sm:$0xff]
    %v882 = vld [vmem:[#allocation15 + $0x40] sm:$0xff]
    %v883 = vld [vmem:[#allocation15 + $0x48] sm:$0xff]
    %v884 = vld [vmem:[#allocation15 + $0x50] sm:$0xff]
    %v885 = vld [vmem:[#allocation15 + $0x58] sm:$0xff]
    %v886 = vld [vmem:[#allocation15 + $0x60] sm:$0xff]
    %v887 = vld [vmem:[#allocation15 + $0x68] sm:$0xff]
    %v888 = vld [vmem:[#allocation15 + $0x70] sm:$0xff]
    %v889 = vld [vmem:[#allocation15 + $0x78] sm:$0xff]
    %v890 = vld [vmem:[%s13] sm:$0x1]
    %v892 = vlaneseq
    %v893 = vshrl.u32 %v892, 7
    %v894 = vsub.s32 0, %v893
    %v895 = vrot.slane %v890, %v894
    %897 = vmatprep.subr.mxu0 0.0
    %898 = vmatpush1.msra.mxu0 %v889
    %899 = vmatprep.subr.mxu0 0.0
    %900 = vmatpush1.msra.mxu0 %v888
    %901 = vmatprep.subr.mxu0 0.0
    %902 = vmatpush1.msra.mxu0 %v887
    %903 = vmatprep.subr.mxu0 0.0
    %904 = vmatpush1.msra.mxu0 %v886
    %905 = vmatprep.subr.mxu0 0.0
    %906 = vmatpush1.msra.mxu0 %v885
    %907 = vmatprep.subr.mxu0 0.0
    %908 = vmatpush1.msra.mxu0 %v884
    %909 = vmatprep.subr.mxu0 0.0
    %910 = vmatpush1.msra.mxu0 %v883
    %911 = vmatprep.subr.mxu0 0.0
    %912 = vmatpush1.msra.mxu0 %v882
    %913 = vmatprep.subr.mxu0 0.0
    %914 = vmatpush1.msra.mxu0 %v881
    %915 = vmatprep.subr.mxu0 0.0
    %916 = vmatpush1.msra.mxu0 %v880
    %917 = vmatprep.subr.mxu0 0.0
    %918 = vmatpush1.msra.mxu0 %v879
    %919 = vmatprep.subr.mxu0 0.0
    %920 = vmatpush1.msra.mxu0 %v878
    %921 = vmatprep.subr.mxu0 0.0
    %922 = vmatpush1.msra.mxu0 %v877
    %923 = vmatprep.subr.mxu0 0.0
    %924 = vmatpush1.msra.mxu0 %v876
    %925 = vmatprep.subr.mxu0 0.0
    %926 = vmatpush1.msra.mxu0 %v875
    %927 = vmatprep.subr.mxu0 0.0
    %928 = vmatpush1.msra.mxu0 %v874
    %929 = vmatprep.subr.mxu0 0.0
    %930 = vmatpush2.msra.mxu0 0.0
    %931 = vmatprep.subr.mxu0 0.0
    %932 = vmatpush2.msra.mxu0 0.0
    %933 = vmatprep.subr.mxu0 0.0
    %934 = vmatpush2.msra.mxu0 0.0
    %935 = vmatprep.subr.mxu0 0.0
    %936 = vmatpush2.msra.mxu0 0.0
    %937 = vmatprep.subr.mxu0 0.0
    %938 = vmatpush2.msra.mxu0 0.0
    %939 = vmatprep.subr.mxu0 0.0
    %940 = vmatpush2.msra.mxu0 0.0
    %941 = vmatprep.subr.mxu0 0.0
    %942 = vmatpush2.msra.mxu0 0.0
    %943 = vmatprep.subr.mxu0 0.0
    %944 = vmatpush2.msra.mxu0 0.0
    %945 = vmatprep.subr.mxu0 0.0
    %946 = vmatpush2.msra.mxu0 0.0
    %947 = vmatprep.subr.mxu0 0.0
    %948 = vmatpush2.msra.mxu0 0.0
    %949 = vmatprep.subr.mxu0 0.0
    %950 = vmatpush2.msra.mxu0 0.0
    %951 = vmatprep.subr.mxu0 0.0
    %952 = vmatpush2.msra.mxu0 0.0
    %953 = vmatprep.subr.mxu0 0.0
    %954 = vmatpush2.msra.mxu0 0.0
    %955 = vmatprep.subr.mxu0 0.0
    %956 = vmatpush2.msra.mxu0 0.0
    %957 = vmatprep.subr.mxu0 0.0
    %958 = vmatpush2.msra.mxu0 0.0
    %959 = vmatprep.subr.mxu0 0.0
    %960 = vmatpush2.msra.mxu0 0.0
    %961 = vmatprep.mubr.f32.mxu0 0.0
    %962 = vmatmul.mubr.f32.gmra.mxu0 %v873
    %v963 = vpop.f32.mrf.mxu0
    %v964 = vadd.f32 %v895, %v963
    %v965 = vpop.f32.mrf.mxu0
    %966 = vdwg.mxu0
    %v967 = vmax.f32 %v964, 0.0
    %v968 = vld [vmem:[%s14] sm:$0x1]
    %v970 = vlaneseq
    %v971 = vshrl.u32 %v970, 7
    %v972 = vsub.s32 0, %v971
    %v973 = vrot.slane %v968, %v972
    %v975 = vmul.f32 %v967, %v973
    %vm976 = vcmask 1041408
    %v977 = vsel %vm976, %v975, 0.0
    %978 = vadd.xlane.f32.xlu0 %v977
    %v979 = vpop.xlane.xlu0 %978
    %s980 = sld [smem:[#allocation3]]
    %v981 = vstv %s980
    %v982 = vadd.f32 %v979, %v981
    %vm983 = vcmask 1024
    %984 = vst.msk [vmem:[%s17] sm:$0x3] %vm983, %v982
    // Predicated region
    $region102: #{tpu_custom_call.1} parent=1 // pred_check
      _
    $region103: #{tpu_custom_call.1} parent=1 // pred_check_branch
      %986 = sbr.rel (0) target = $region105
    $region104: #{tpu_custom_call.1} parent=1 // pred_region
      _
    $region105: #{tpu_custom_call.1} parent=1 // pred_fallthru
      _
    // Predicated region
    $region106: #{tpu_custom_call.1} parent=1 // pred_check
      _
    $region107: #{tpu_custom_call.1} parent=1 // pred_check_branch
      %988 = sbr.rel (0) target = $region109
    $region108: #{tpu_custom_call.1} parent=1 // pred_region
      _
    $region109: #{tpu_custom_call.1} parent=1 // pred_fallthru
      _
    %989 = vsyncpa [#allocation5], 1
    %990 = vsyncpa [#allocation7], 1
    %991 = vsyncpa [#allocation10], 1
    %992 = vsyncpa [#allocation13], 1
    %993 = vsyncpa [#allocation16], 1

</llo_original>
